<compile_context>
chip_gen: v6e
topology: v6e:2x2x1
jax: 0.10.0
libtpu: 0.0.40
codegen_flags: <defaults>
</compile_context>

<pallas_src>
import functools

import jax
import jax.numpy as jnp
import numpy as np
from jax import lax
from jax.experimental import pallas as pl
from jax.experimental.pallas import tpu as pltpu


def _round_up(a: int, b: int) -> int:
    return ((a + b - 1) // b) * b


def _choose_m_tiling(M: int):
    """(tm, Mpad): minimize zero-padding; tiny batches use one full-extent block
    (no padding needed when the block dim equals the full array dim)."""
    if M <= 128:
        return M, M
    best = None
    for tm in (128, 64, 32, 16, 8):      # <=128 keeps >=2 M blocks for v7x megacore
        mpad = _round_up(M, tm)
        key = (mpad - M, -tm)            # minimize waste, then prefer larger tile
        if best is None or key < best[0]:
            best = (key, tm, mpad)
    return best[1], best[2]


def _linear_kernel(x_ref, w_ref, o_ref):
    # Single K block: x_ref (tm, Kpad) bf16, w_ref (tn, Kpad) bf16 (native
    # (out, in) layout) -> o_ref (tm, tn) f32.  Contract last dims (x @ W.T).
    o_ref[...] = lax.dot_general(
        x_ref[...], w_ref[...],
        dimension_numbers=(((1,), (1,)), ((), ())),
        preferred_element_type=jnp.float32,
    )


def _linear_kernel_ktiled(x_ref, w_ref, o_ref):
    # Fallback for very large in_features: accumulate directly into the f32
    # output block (VMEM-resident across the arbitrary K axis); no scratch.
    @pl.when(pl.program_id(2) == 0)
    def _init():
        o_ref[...] = jnp.zeros_like(o_ref)

    o_ref[...] += lax.dot_general(
        x_ref[...], w_ref[...],
        dimension_numbers=(((1,), (1,)), ((), ())),
        preferred_element_type=jnp.float32,
    )


def prepare_weight(weight, dtype=jnp.bfloat16):
    """One-time weight prep (hoisted out of the forward path): cast, then
    zero-pad (num_classes, in_features) -> (Npad, Kpad); no transpose."""
    num_classes, in_features = weight.shape
    n_pad = _round_up(num_classes, 128) - num_classes
    k_pad = _round_up(in_features, 128) - in_features
    w = weight.astype(dtype)
    if n_pad or k_pad:
        w = jnp.pad(w, ((0, n_pad), (0, k_pad)))
    return w


@functools.partial(jax.jit, static_argnames=("num_classes",))
def dense_classifier_forward(x, w_padded, *, num_classes):
    """DenseClassifier forward: Flatten -> Linear(in_features, num_classes), no bias.

    x:        (N, C, H, W) (any leading-batch shape)
    w_padded: prepare_weight(weight) -> (Npad, Kpad) bf16, padded to 128s
    returns:  (N, num_classes) float32
    """
    M = x.shape[0]
    x_flat = x.reshape(M, -1)                      # Flatten == row-major view
    K = x_flat.shape[1]
    Npad, Kpad = w_padded.shape
    assert Kpad == _round_up(K, 128), "weight/input in_features mismatch"

    tm, Mpad = _choose_m_tiling(M)
    tn = 256 if Npad % 256 == 0 else 128           # feed 256-wide MXU on v6e/v7x

    mm_dtype = w_padded.dtype
    x_p = x_flat.astype(mm_dtype)                  # cast before pad (half the bytes)
    if (Mpad - M) or (Kpad - K):
        x_p = jnp.pad(x_p, ((0, Mpad - M), (0, Kpad - K)))

    grid_n = Npad // tn
    grid_m = Mpad // tm
    itemsize = jnp.dtype(mm_dtype).itemsize

    cost = pl.CostEstimate(
        flops=2 * Mpad * Kpad * Npad,
        transcendentals=0,
        bytes_accessed=(Mpad * Kpad * itemsize
                        + Kpad * Npad * itemsize
                        + Mpad * Npad * 4),
    )

    # Collapse the K grid axis whenever the single-K-block footprint
    # (double-buffered inputs + output tile) fits comfortably in scoped VMEM.
    single_k_bytes = 2 * (tm * Kpad + tn * Kpad) * itemsize + 2 * tm * tn * 4
    use_single_k = single_k_bytes <= 12 * 1024 * 1024

    if use_single_k:
        out_pad = pl.pallas_call(
            _linear_kernel,
            out_shape=jax.ShapeDtypeStruct((Mpad, Npad), jnp.float32),
            grid_spec=pltpu.PrefetchScalarGridSpec(
                num_scalar_prefetch=0,
                grid=(grid_n, grid_m),             # M innermost: weight block is
                in_specs=[                         # fetched once per N tile and
                    pl.BlockSpec((tm, Kpad), lambda j, i: (i, 0)),   # reused
                    pl.BlockSpec((tn, Kpad), lambda j, i: (j, 0)),   # across M
                ],
                out_specs=pl.BlockSpec((tm, tn), lambda j, i: (i, j)),
            ),
            compiler_params=pltpu.CompilerParams(
                dimension_semantics=("parallel", "parallel"),
            ),
            cost_estimate=cost,
        )(x_p, w_padded)
    else:
        tk = 512 if Kpad % 512 == 0 else (256 if Kpad % 256 == 0 else 128)
        out_pad = pl.pallas_call(
            _linear_kernel_ktiled,
            out_shape=jax.ShapeDtypeStruct((Mpad, Npad), jnp.float32),
            grid_spec=pltpu.PrefetchScalarGridSpec(
                num_scalar_prefetch=0,
                grid=(grid_n, grid_m, Kpad // tk),
                in_specs=[
                    pl.BlockSpec((tm, tk), lambda j, i, k: (i, k)),
                    pl.BlockSpec((tn, tk), lambda j, i, k: (j, k)),
                ],
                out_specs=pl.BlockSpec((tm, tn), lambda j, i, k: (i, j)),
            ),
            compiler_params=pltpu.CompilerParams(
                dimension_semantics=("parallel", "parallel", "arbitrary"),
            ),
            cost_estimate=cost,
        )(x_p, w_padded)

    # Slice the zero padding back off.
    return out_pad[:M, :num_classes]


def _reference(x, weight):
    """Pure-JAX reference: flatten -> x @ W.T (bias-free Linear), f32."""
    N = x.shape[0]
    return jnp.dot(x.reshape(N, -1).astype(jnp.float32),
                   weight.astype(jnp.float32).T)


if __name__ == "__main__":
    # cfg consistent with the module: imSi=16, imCh=4 -> in_features = 16*16*4
    cfg = {"imSi": 16, "imCh": 4, "netSi": 1.0, "num_classes": 10}
    batch = 2
    in_features = cfg["imSi"] * cfg["imSi"] * cfg["imCh"]   # 1024

    key = jax.random.PRNGKey(0)
    kx, kw = jax.random.split(key)
    x = jax.random.normal(
        kx, (batch, cfg["imCh"], cfg["imSi"], cfg["imSi"]), dtype=jnp.float32
    )
    # nn.Linear default init: U(-1/sqrt(in_features), 1/sqrt(in_features))
    bound = 1.0 / np.sqrt(in_features)
    weight = jax.random.uniform(
        kw, (cfg["num_classes"], in_features),
        dtype=jnp.float32, minval=-bound, maxval=bound,
    )

    # Weight prep is hoisted out of the per-call forward path (done once).
    w_padded = jax.block_until_ready(prepare_weight(weight))

    out = dense_classifier_forward(x, w_padded, num_classes=cfg["num_classes"])
    out = jax.block_until_ready(out)

    ref = jax.block_until_ready(_reference(x, weight))
    # bf16 matmul operands with f32 accumulation -> ~0.5-1% relative error
    np.testing.assert_allclose(
        np.asarray(out), np.asarray(ref), rtol=2e-2, atol=2e-2
    )

    assert out.shape == (batch, cfg["num_classes"])
    print("KERNEL_OK")
</pallas_src>

<mosaic_0001>
module attributes {stable_mosaic.version = 11 : i64} {
  func.func @_linear_kernel(%arg0: i32, %arg1: i32, %arg2: memref<2x1024xbf16, #tpu.memory_space<vmem>>, %arg3: memref<128x1024xbf16, #tpu.memory_space<vmem>>, %arg4: memref<2x128xf32, #tpu.memory_space<vmem>>) attributes {dimension_semantics = [#tpu.dimension_semantics<parallel>, #tpu.dimension_semantics<parallel>], iteration_bounds = array<i64: 1, 1>, scalar_prefetch = 0 : i64, scratch_operands = 0 : i64, tpu.core_type = #tpu.core_type<tc>, window_params = [{transform_indices = @transform_0, window_bounds = array<i64: 2, 1024>}, {transform_indices = @transform_1, window_bounds = array<i64: 128, 1024>}, {transform_indices = @transform_2, window_bounds = array<i64: 2, 128>}]} {
    %c0 = arith.constant 0 : index
    %c0_0 = arith.constant 0 : index
    %0 = vector.load %arg2[%c0, %c0_0] : memref<2x1024xbf16, #tpu.memory_space<vmem>>, vector<2x1024xbf16>
    %c0_1 = arith.constant 0 : index
    %c0_2 = arith.constant 0 : index
    %1 = vector.load %arg3[%c0_1, %c0_2] : memref<128x1024xbf16, #tpu.memory_space<vmem>>, vector<128x1024xbf16>
    %cst = arith.constant dense<0.000000e+00> : vector<2x128xf32>
    %2 = tpu.matmul %0, %1, %cst {dimension_numbers = #tpu.dot_dimension_numbers<[1], [1], [0], [0], [0, 0, 1, 0], [], []>} : vector<2x1024xbf16>, vector<128x1024xbf16>, vector<2x128xf32> -> vector<2x128xf32>
    %c0_3 = arith.constant 0 : index
    %c0_4 = arith.constant 0 : index
    %3 = vector.load %arg4[%c0_3, %c0_4] : memref<2x128xf32, #tpu.memory_space<vmem>>, vector<2x128xf32>
    tpu.vector_store %arg4[%c0_3, %c0_4], %2 {strides = array<i32>} : memref<2x128xf32, #tpu.memory_space<vmem>>, vector<2x128xf32>,
    return
  }
  func.func @transform_0(%arg0: i32, %arg1: i32) -> (i32, i32) {
    %c0_i32 = arith.constant 0 : i32
    %c0_i32_0 = arith.constant 0 : i32
    return %arg1, %c0_i32 : i32, i32
  }
  func.func @transform_1(%arg0: i32, %arg1: i32) -> (i32, i32) {
    %c0_i32 = arith.constant 0 : i32
    %c0_i32_0 = arith.constant 0 : i32
    return %arg0, %c0_i32 : i32, i32
  }
  func.func @transform_2(%arg0: i32, %arg1: i32) -> (i32, i32) {
    %c0_i32 = arith.constant 0 : i32
    return %arg1, %arg0 : i32, i32
  }
}

</mosaic_0001>

<llo_original>
// kernel: dense_classifier_forward.1
$region0: #{dense_classifier_forward.1}
  #allocation0 [shape = 'u32[]', space=smem, size = 0x4, offset = 0x4, fixed_abs, tag = 'smem constant byte address 0x4 - core index']
  #allocation1 [shape = 'u32[144,128]{1,0:T(1,128)}', space=vmem, size = 0x12000, scoped, tag = 'internal scratch']
  %s0 = inlined_call_operand.vmem [shape: bf16[2,1024], index: 0, kind: input, shape index: {}]
  %s1 = inlined_call_operand.hbm [shape: bf16[128,1024], index: 1, kind: input, shape index: {}]
  %s2 = inlined_call_operand.hbm [shape: f32[2,128], index: 2, kind: output, shape index: {}]
  %s3 = sld [smem:[#allocation0]]
  $region22: #{dense_classifier_forward.1} parent=0
    _
  %s5 = ssub.s32 1, %s3
  %s6 = scalar_select 0, %s5, %s3
  $region1: #{dense_classifier_forward.1} parent=0
    #allocation2 [shape = 'u8[262144]{0}', space=vmem, size = 0x40000, scoped, tag = 'input window, operand 1, single buffered']
    #allocation3 [shape = 's32[1]{0}', space=sflag, size = 0x4, scoped, tag = 'scoped memory for dense_classifier_forward.1']
    #allocation4 [shape = 's32[1]{0}', space=sflag, size = 0x4, scoped, tag = 'scoped memory for dense_classifier_forward.1']
    #allocation5 [shape = 'u8[1024]{0}', space=vmem, size = 0x400, scoped, tag = 'output window, operand 0, single buffered']
    %7 = vsyncpa [#allocation3], 0
    %8 = vsyncpa [#allocation4], 0
    // Predicated region
    $region2: #{dense_classifier_forward.1} parent=1 // pred_check
      _
    $region3: #{dense_classifier_forward.1} parent=1 // pred_check_branch
      %10 = sbr.rel (0) target = $region5
    $region4: #{dense_classifier_forward.1} parent=1 // pred_region
      _
    $region5: #{dense_classifier_forward.1} parent=1 // pred_fallthru
      _
    // Predicated region
    $region6: #{dense_classifier_forward.1} parent=1 // pred_check
      _
    $region7: #{dense_classifier_forward.1} parent=1 // pred_check_branch
      %12 = sbr.rel (0) target = $region9
    $region8: #{dense_classifier_forward.1} parent=1 // pred_region
      %s14 = ssub.s32 8192, 8192
      %15 = vsyncadd [#allocation3], %s14
      %s16 = sshll.u32 [#allocation2], 4
      %s17 = int_to_ptr.vmem [resolvable:$true] %s16
      %22 = dma.hbm_to_vmem [thread:$0]  %s1, 8192, %s17, [#allocation3], 512, 512, 32
    $region9: #{dense_classifier_forward.1} parent=1 // pred_fallthru
      _
    // Predicated region
    $region10: #{dense_classifier_forward.1} parent=1 // pred_check
      _
    $region11: #{dense_classifier_forward.1} parent=1 // pred_check_branch
      %24 = sbr.rel (0) target = $region13
    $region12: #{dense_classifier_forward.1} parent=1 // pred_region
      %25 = dma.done [#allocation3], 8192
    $region13: #{dense_classifier_forward.1} parent=1 // pred_fallthru
      _
    %v27 = vld [vmem:[%s0] sm:$0xff]
    %v28 = vld [vmem:[#allocation2] sm:$0xff]
    %v29 = vld [vmem:[#allocation2 + $0x8] sm:$0xff]
    %v30 = vld [vmem:[#allocation2 + $0x10] sm:$0xff]
    %v31 = vld [vmem:[#allocation2 + $0x18] sm:$0xff]
    %v32 = vld [vmem:[#allocation2 + $0x20] sm:$0xff]
    %v33 = vld [vmem:[#allocation2 + $0x28] sm:$0xff]
    %v34 = vld [vmem:[#allocation2 + $0x30] sm:$0xff]
    %v35 = vld [vmem:[#allocation2 + $0x38] sm:$0xff]
    %v36 = vld [vmem:[#allocation2 + $0x40] sm:$0xff]
    %v37 = vld [vmem:[#allocation2 + $0x48] sm:$0xff]
    %v38 = vld [vmem:[#allocation2 + $0x50] sm:$0xff]
    %v39 = vld [vmem:[#allocation2 + $0x58] sm:$0xff]
    %v40 = vld [vmem:[#allocation2 + $0x60] sm:$0xff]
    %v41 = vld [vmem:[#allocation2 + $0x68] sm:$0xff]
    %v42 = vld [vmem:[#allocation2 + $0x70] sm:$0xff]
    %v43 = vld [vmem:[#allocation2 + $0x78] sm:$0xff]
    %v44 = vld [vmem:[#allocation2 + $0x80] sm:$0xff]
    %v45 = vld [vmem:[#allocation2 + $0x88] sm:$0xff]
    %v46 = vld [vmem:[#allocation2 + $0x90] sm:$0xff]
    %v47 = vld [vmem:[#allocation2 + $0x98] sm:$0xff]
    %v48 = vld [vmem:[#allocation2 + $0xa0] sm:$0xff]
    %v49 = vld [vmem:[#allocation2 + $0xa8] sm:$0xff]
    %v50 = vld [vmem:[#allocation2 + $0xb0] sm:$0xff]
    %v51 = vld [vmem:[#allocation2 + $0xb8] sm:$0xff]
    %v52 = vld [vmem:[#allocation2 + $0xc0] sm:$0xff]
    %v53 = vld [vmem:[#allocation2 + $0xc8] sm:$0xff]
    %v54 = vld [vmem:[#allocation2 + $0xd0] sm:$0xff]
    %v55 = vld [vmem:[#allocation2 + $0xd8] sm:$0xff]
    %v56 = vld [vmem:[#allocation2 + $0xe0] sm:$0xff]
    %v57 = vld [vmem:[#allocation2 + $0xe8] sm:$0xff]
    %v58 = vld [vmem:[#allocation2 + $0xf0] sm:$0xff]
    %v59 = vld [vmem:[#allocation2 + $0xf8] sm:$0xff]
    %v60 = vld [vmem:[#allocation2 + $0x100] sm:$0xff]
    %v61 = vld [vmem:[#allocation2 + $0x108] sm:$0xff]
    %v62 = vld [vmem:[#allocation2 + $0x110] sm:$0xff]
    %v63 = vld [vmem:[#allocation2 + $0x118] sm:$0xff]
    %v64 = vld [vmem:[#allocation2 + $0x120] sm:$0xff]
    %v65 = vld [vmem:[#allocation2 + $0x128] sm:$0xff]
    %v66 = vld [vmem:[#allocation2 + $0x130] sm:$0xff]
    %v67 = vld [vmem:[#allocation2 + $0x138] sm:$0xff]
    %v68 = vld [vmem:[#allocation2 + $0x140] sm:$0xff]
    %v69 = vld [vmem:[#allocation2 + $0x148] sm:$0xff]
    %v70 = vld [vmem:[#allocation2 + $0x150] sm:$0xff]
    %v71 = vld [vmem:[#allocation2 + $0x158] sm:$0xff]
    %v72 = vld [vmem:[#allocation2 + $0x160] sm:$0xff]
    %v73 = vld [vmem:[#allocation2 + $0x168] sm:$0xff]
    %v74 = vld [vmem:[#allocation2 + $0x170] sm:$0xff]
    %v75 = vld [vmem:[#allocation2 + $0x178] sm:$0xff]
    %v76 = vld [vmem:[#allocation2 + $0x180] sm:$0xff]
    %v77 = vld [vmem:[#allocation2 + $0x188] sm:$0xff]
    %v78 = vld [vmem:[#allocation2 + $0x190] sm:$0xff]
    %v79 = vld [vmem:[#allocation2 + $0x198] sm:$0xff]
    %v80 = vld [vmem:[#allocation2 + $0x1a0] sm:$0xff]
    %v81 = vld [vmem:[#allocation2 + $0x1a8] sm:$0xff]
    %v82 = vld [vmem:[#allocation2 + $0x1b0] sm:$0xff]
    %v83 = vld [vmem:[#allocation2 + $0x1b8] sm:$0xff]
    %v84 = vld [vmem:[#allocation2 + $0x1c0] sm:$0xff]
    %v85 = vld [vmem:[#allocation2 + $0x1c8] sm:$0xff]
    %v86 = vld [vmem:[#allocation2 + $0x1d0] sm:$0xff]
    %v87 = vld [vmem:[#allocation2 + $0x1d8] sm:$0xff]
    %v88 = vld [vmem:[#allocation2 + $0x1e0] sm:$0xff]
    %v89 = vld [vmem:[#allocation2 + $0x1e8] sm:$0xff]
    %v90 = vld [vmem:[#allocation2 + $0x1f0] sm:$0xff]
    %v91 = vld [vmem:[#allocation2 + $0x1f8] sm:$0xff]
    %v93 = vcombine.high %v27, %v27
    %v95 = vunpack.c.l.s4 1966171168
    %v96 = vunpack.c.0.s8 %v95
    %v97 = vlaneseq
    %v98 = vshrl.u32 %v97, 7
    %v99 = vsub.s32 %v96, %v98
    %v100 = vrot.slane %v27, %v99
    %v102 = vunpack.c.l.s4 1966171168
    %v103 = vunpack.c.0.s8 %v102
    %v104 = vlaneseq
    %v105 = vshrl.u32 %v104, 7
    %v106 = vsub.s32 %v103, %v105
    %v107 = vrot.slane %v93, %v106
    %v108 = vcombine.high %v100, %v100
    %v109 = vcombine.high %v107, %v107
    %v111 = vunpack.c.l.s4 1966171168
    %v112 = vunpack.c.0.s8 %v111
    %v113 = vlaneseq
    %v114 = vshrl.u32 %v113, 7
    %v115 = vsub.s32 %v112, %v114
    %v116 = vrot.slane %v100, %v115
    %v118 = vunpack.c.l.s4 1966171168
    %v119 = vunpack.c.0.s8 %v118
    %v120 = vlaneseq
    %v121 = vshrl.u32 %v120, 7
    %v122 = vsub.s32 %v119, %v121
    %v123 = vrot.slane %v107, %v122
    %v125 = vunpack.c.l.s4 1966171168
    %v126 = vunpack.c.0.s8 %v125
    %v127 = vlaneseq
    %v128 = vshrl.u32 %v127, 7
    %v129 = vsub.s32 %v126, %v128
    %v130 = vrot.slane %v108, %v129
    %v132 = vunpack.c.l.s4 1966171168
    %v133 = vunpack.c.0.s8 %v132
    %v134 = vlaneseq
    %v135 = vshrl.u32 %v134, 7
    %v136 = vsub.s32 %v133, %v135
    %v137 = vrot.slane %v109, %v136
    %v138 = vcombine.high %v116, %v116
    %v139 = vcombine.high %v123, %v123
    %v140 = vcombine.high %v130, %v130
    %v141 = vcombine.high %v137, %v137
    %v214 = vunpack.c.l.b16 %v28
    %v215 = vunpack.c.h.b16 %v28
    %v216 = vunpack.c.l.b16 %v29
    %v217 = vunpack.c.h.b16 %v29
    %v218 = vunpack.c.l.b16 %v30
    %v219 = vunpack.c.h.b16 %v30
    %v220 = vunpack.c.l.b16 %v31
    %v221 = vunpack.c.h.b16 %v31
    %v222 = vunpack.c.l.b16 %v32
    %v223 = vunpack.c.h.b16 %v32
    %v224 = vunpack.c.l.b16 %v33
    %v225 = vunpack.c.h.b16 %v33
    %v226 = vunpack.c.l.b16 %v34
    %v227 = vunpack.c.h.b16 %v34
    %v228 = vunpack.c.l.b16 %v35
    %v229 = vunpack.c.h.b16 %v35
    %v230 = vunpack.c.l.b16 %v36
    %v231 = vunpack.c.h.b16 %v36
    %v232 = vunpack.c.l.b16 %v37
    %v233 = vunpack.c.h.b16 %v37
    %v234 = vunpack.c.l.b16 %v38
    %v235 = vunpack.c.h.b16 %v38
    %v236 = vunpack.c.l.b16 %v39
    %v237 = vunpack.c.h.b16 %v39
    %v238 = vunpack.c.l.b16 %v40
    %v239 = vunpack.c.h.b16 %v40
    %v240 = vunpack.c.l.b16 %v41
    %v241 = vunpack.c.h.b16 %v41
    %v242 = vunpack.c.l.b16 %v42
    %v243 = vunpack.c.h.b16 %v42
    %v244 = vunpack.c.l.b16 %v43
    %v245 = vunpack.c.h.b16 %v43
    %v246 = vunpack.c.l.b16 %v44
    %v247 = vunpack.c.h.b16 %v44
    %v248 = vunpack.c.l.b16 %v45
    %v249 = vunpack.c.h.b16 %v45
    %v250 = vunpack.c.l.b16 %v46
    %v251 = vunpack.c.h.b16 %v46
    %v252 = vunpack.c.l.b16 %v47
    %v253 = vunpack.c.h.b16 %v47
    %v254 = vunpack.c.l.b16 %v48
    %v255 = vunpack.c.h.b16 %v48
    %v256 = vunpack.c.l.b16 %v49
    %v257 = vunpack.c.h.b16 %v49
    %v258 = vunpack.c.l.b16 %v50
    %v259 = vunpack.c.h.b16 %v50
    %v260 = vunpack.c.l.b16 %v51
    %v261 = vunpack.c.h.b16 %v51
    %v262 = vunpack.c.l.b16 %v52
    %v263 = vunpack.c.h.b16 %v52
    %v264 = vunpack.c.l.b16 %v53
    %v265 = vunpack.c.h.b16 %v53
    %v266 = vunpack.c.l.b16 %v54
    %v267 = vunpack.c.h.b16 %v54
    %v268 = vunpack.c.l.b16 %v55
    %v269 = vunpack.c.h.b16 %v55
    %v270 = vunpack.c.l.b16 %v56
    %v271 = vunpack.c.h.b16 %v56
    %v272 = vunpack.c.l.b16 %v57
    %v273 = vunpack.c.h.b16 %v57
    %v274 = vunpack.c.l.b16 %v58
    %v275 = vunpack.c.h.b16 %v58
    %v276 = vunpack.c.l.b16 %v59
    %v277 = vunpack.c.h.b16 %v59
    %v278 = vunpack.c.l.b16 %v60
    %v279 = vunpack.c.h.b16 %v60
    %v280 = vunpack.c.l.b16 %v61
    %v281 = vunpack.c.h.b16 %v61
    %v282 = vunpack.c.l.b16 %v62
    %v283 = vunpack.c.h.b16 %v62
    %v284 = vunpack.c.l.b16 %v63
    %v285 = vunpack.c.h.b16 %v63
    %v286 = vunpack.c.l.b16 %v64
    %v287 = vunpack.c.h.b16 %v64
    %v288 = vunpack.c.l.b16 %v65
    %v289 = vunpack.c.h.b16 %v65
    %v290 = vunpack.c.l.b16 %v66
    %v291 = vunpack.c.h.b16 %v66
    %v292 = vunpack.c.l.b16 %v67
    %v293 = vunpack.c.h.b16 %v67
    %v294 = vunpack.c.l.b16 %v68
    %v295 = vunpack.c.h.b16 %v68
    %v296 = vunpack.c.l.b16 %v69
    %v297 = vunpack.c.h.b16 %v69
    %v298 = vunpack.c.l.b16 %v70
    %v299 = vunpack.c.h.b16 %v70
    %v300 = vunpack.c.l.b16 %v71
    %v301 = vunpack.c.h.b16 %v71
    %v302 = vunpack.c.l.b16 %v72
    %v303 = vunpack.c.h.b16 %v72
    %v304 = vunpack.c.l.b16 %v73
    %v305 = vunpack.c.h.b16 %v73
    %v306 = vunpack.c.l.b16 %v74
    %v307 = vunpack.c.h.b16 %v74
    %v308 = vunpack.c.l.b16 %v75
    %v309 = vunpack.c.h.b16 %v75
    %v310 = vunpack.c.l.b16 %v76
    %v311 = vunpack.c.h.b16 %v76
    %v312 = vunpack.c.l.b16 %v77
    %v313 = vunpack.c.h.b16 %v77
    %v314 = vunpack.c.l.b16 %v78
    %v315 = vunpack.c.h.b16 %v78
    %v316 = vunpack.c.l.b16 %v79
    %v317 = vunpack.c.h.b16 %v79
    %v318 = vunpack.c.l.b16 %v80
    %v319 = vunpack.c.h.b16 %v80
    %v320 = vunpack.c.l.b16 %v81
    %v321 = vunpack.c.h.b16 %v81
    %v322 = vunpack.c.l.b16 %v82
    %v323 = vunpack.c.h.b16 %v82
    %v324 = vunpack.c.l.b16 %v83
    %v325 = vunpack.c.h.b16 %v83
    %v326 = vunpack.c.l.b16 %v84
    %v327 = vunpack.c.h.b16 %v84
    %v328 = vunpack.c.l.b16 %v85
    %v329 = vunpack.c.h.b16 %v85
    %v330 = vunpack.c.l.b16 %v86
    %v331 = vunpack.c.h.b16 %v86
    %v332 = vunpack.c.l.b16 %v87
    %v333 = vunpack.c.h.b16 %v87
    %v334 = vunpack.c.l.b16 %v88
    %v335 = vunpack.c.h.b16 %v88
    %v336 = vunpack.c.l.b16 %v89
    %v337 = vunpack.c.h.b16 %v89
    %v338 = vunpack.c.l.b16 %v90
    %v339 = vunpack.c.h.b16 %v90
    %v340 = vunpack.c.l.b16 %v91
    %v341 = vunpack.c.h.b16 %v91
    %v342 = vpack.c.b16 %v222, %v214
    %v343 = vpack.c.b16 %v223, %v215
    %v344 = vpack.c.b16 %v224, %v216
    %v345 = vpack.c.b16 %v225, %v217
    %v346 = vpack.c.b16 %v226, %v218
    %v347 = vpack.c.b16 %v227, %v219
    %v348 = vpack.c.b16 %v228, %v220
    %v349 = vpack.c.b16 %v229, %v221
    %v350 = vpack.c.b16 %v238, %v230
    %v351 = vpack.c.b16 %v239, %v231
    %v352 = vpack.c.b16 %v240, %v232
    %v353 = vpack.c.b16 %v241, %v233
    %v354 = vpack.c.b16 %v242, %v234
    %v355 = vpack.c.b16 %v243, %v235
    %v356 = vpack.c.b16 %v244, %v236
    %v357 = vpack.c.b16 %v245, %v237
    %v358 = vpack.c.b16 %v254, %v246
    %v359 = vpack.c.b16 %v255, %v247
    %v360 = vpack.c.b16 %v256, %v248
    %v361 = vpack.c.b16 %v257, %v249
    %v362 = vpack.c.b16 %v258, %v250
    %v363 = vpack.c.b16 %v259, %v251
    %v364 = vpack.c.b16 %v260, %v252
    %v365 = vpack.c.b16 %v261, %v253
    %v366 = vpack.c.b16 %v270, %v262
    %v367 = vpack.c.b16 %v271, %v263
    %v368 = vpack.c.b16 %v272, %v264
    %v369 = vpack.c.b16 %v273, %v265
    %v370 = vpack.c.b16 %v274, %v266
    %v371 = vpack.c.b16 %v275, %v267
    %v372 = vpack.c.b16 %v276, %v268
    %v373 = vpack.c.b16 %v277, %v269
    %v374 = vpack.c.b16 %v286, %v278
    %v375 = vpack.c.b16 %v287, %v279
    %v376 = vpack.c.b16 %v288, %v280
    %v377 = vpack.c.b16 %v289, %v281
    %v378 = vpack.c.b16 %v290, %v282
    %v379 = vpack.c.b16 %v291, %v283
    %v380 = vpack.c.b16 %v292, %v284
    %v381 = vpack.c.b16 %v293, %v285
    %v382 = vpack.c.b16 %v302, %v294
    %v383 = vpack.c.b16 %v303, %v295
    %v384 = vpack.c.b16 %v304, %v296
    %v385 = vpack.c.b16 %v305, %v297
    %v386 = vpack.c.b16 %v306, %v298
    %v387 = vpack.c.b16 %v307, %v299
    %v388 = vpack.c.b16 %v308, %v300
    %v389 = vpack.c.b16 %v309, %v301
    %v390 = vpack.c.b16 %v318, %v310
    %v391 = vpack.c.b16 %v319, %v311
    %v392 = vpack.c.b16 %v320, %v312
    %v393 = vpack.c.b16 %v321, %v313
    %v394 = vpack.c.b16 %v322, %v314
    %v395 = vpack.c.b16 %v323, %v315
    %v396 = vpack.c.b16 %v324, %v316
    %v397 = vpack.c.b16 %v325, %v317
    %v398 = vpack.c.b16 %v334, %v326
    %v399 = vpack.c.b16 %v335, %v327
    %v400 = vpack.c.b16 %v336, %v328
    %v401 = vpack.c.b16 %v337, %v329
    %v402 = vpack.c.b16 %v338, %v330
    %v403 = vpack.c.b16 %v339, %v331
    %v404 = vpack.c.b16 %v340, %v332
    %v405 = vpack.c.b16 %v341, %v333
    %470 = vmatprep.subr.bf16.mxu0 %v399
    %471 = vmatpush1.bf16.xpose.msra.mxu0 %v398
    %472 = vmatprep.subr.bf16.mxu0 %v391
    %473 = vmatpush1.bf16.xpose.msra.mxu0 %v390
    %474 = vmatprep.subr.bf16.mxu0 %v383
    %475 = vmatpush1.bf16.xpose.msra.mxu0 %v382
    %476 = vmatprep.subr.bf16.mxu0 %v375
    %477 = vmatpush1.bf16.xpose.msra.mxu0 %v374
    %478 = vmatprep.subr.bf16.mxu0 %v367
    %479 = vmatpush1.bf16.xpose.msra.mxu0 %v366
    %480 = vmatprep.subr.bf16.mxu0 %v359
    %481 = vmatpush1.bf16.xpose.msra.mxu0 %v358
    %482 = vmatprep.subr.bf16.mxu0 %v351
    %483 = vmatpush1.bf16.xpose.msra.mxu0 %v350
    %484 = vmatprep.subr.bf16.mxu0 %v343
    %485 = vmatpush1.bf16.xpose.msra.mxu0 %v342
    %486 = vmatprep.subr.bf16.mxu0 0
    %487 = vmatpush2.bf16.xpose.msra.mxu0 0
    %488 = vmatprep.subr.bf16.mxu0 0
    %489 = vmatpush2.bf16.xpose.msra.mxu0 0
    %490 = vmatprep.subr.bf16.mxu0 0
    %491 = vmatpush2.bf16.xpose.msra.mxu0 0
    %492 = vmatprep.subr.bf16.mxu0 0
    %493 = vmatpush2.bf16.xpose.msra.mxu0 0
    %494 = vmatprep.subr.bf16.mxu0 0
    %495 = vmatpush2.bf16.xpose.msra.mxu0 0
    %496 = vmatprep.subr.bf16.mxu0 0
    %497 = vmatpush2.bf16.xpose.msra.mxu0 0
    %498 = vmatprep.subr.bf16.mxu0 0
    %499 = vmatpush2.bf16.xpose.msra.mxu0 0
    %500 = vmatprep.subr.bf16.mxu0 0
    %501 = vmatpush2.bf16.xpose.msra.mxu0 0
    %502 = vmatprep.mubr.bf16.mxu0 %v130
    %503 = vmatmul.mubr.bf16.gmra.mxu0 %v116
    %v504 = vpop.f32.mrf.mxu0
    %v505 = vadd.f32 0.0, %v504
    %v506 = vpop.f32.mrf.mxu0
    %v507 = vpop.f32.mrf.mxu0
    %v508 = vpop.f32.mrf.mxu0
    %509 = vdwg.mxu0
    %510 = vmatprep.subr.bf16.mxu0 %v401
    %511 = vmatpush1.bf16.xpose.msra.mxu0 %v400
    %512 = vmatprep.subr.bf16.mxu0 %v393
    %513 = vmatpush1.bf16.xpose.msra.mxu0 %v392
    %514 = vmatprep.subr.bf16.mxu0 %v385
    %515 = vmatpush1.bf16.xpose.msra.mxu0 %v384
    %516 = vmatprep.subr.bf16.mxu0 %v377
    %517 = vmatpush1.bf16.xpose.msra.mxu0 %v376
    %518 = vmatprep.subr.bf16.mxu0 %v369
    %519 = vmatpush1.bf16.xpose.msra.mxu0 %v368
    %520 = vmatprep.subr.bf16.mxu0 %v361
    %521 = vmatpush1.bf16.xpose.msra.mxu0 %v360
    %522 = vmatprep.subr.bf16.mxu0 %v353
    %523 = vmatpush1.bf16.xpose.msra.mxu0 %v352
    %524 = vmatprep.subr.bf16.mxu0 %v345
    %525 = vmatpush1.bf16.xpose.msra.mxu0 %v344
    %526 = vmatprep.subr.bf16.mxu0 0
    %527 = vmatpush2.bf16.xpose.msra.mxu0 0
    %528 = vmatprep.subr.bf16.mxu0 0
    %529 = vmatpush2.bf16.xpose.msra.mxu0 0
    %530 = vmatprep.subr.bf16.mxu0 0
    %531 = vmatpush2.bf16.xpose.msra.mxu0 0
    %532 = vmatprep.subr.bf16.mxu0 0
    %533 = vmatpush2.bf16.xpose.msra.mxu0 0
    %534 = vmatprep.subr.bf16.mxu0 0
    %535 = vmatpush2.bf16.xpose.msra.mxu0 0
    %536 = vmatprep.subr.bf16.mxu0 0
    %537 = vmatpush2.bf16.xpose.msra.mxu0 0
    %538 = vmatprep.subr.bf16.mxu0 0
    %539 = vmatpush2.bf16.xpose.msra.mxu0 0
    %540 = vmatprep.subr.bf16.mxu0 0
    %541 = vmatpush2.bf16.xpose.msra.mxu0 0
    %542 = vmatprep.mubr.bf16.mxu0 %v140
    %543 = vmatmul.mubr.bf16.gmra.mxu0 %v138
    %v544 = vpop.f32.mrf.mxu0
    %v545 = vadd.f32 %v505, %v544
    %v546 = vpop.f32.mrf.mxu0
    %v547 = vpop.f32.mrf.mxu0
    %v548 = vpop.f32.mrf.mxu0
    %549 = vdwg.mxu0
    %550 = vmatprep.subr.bf16.mxu0 %v403
    %551 = vmatpush1.bf16.xpose.msra.mxu0 %v402
    %552 = vmatprep.subr.bf16.mxu0 %v395
    %553 = vmatpush1.bf16.xpose.msra.mxu0 %v394
    %554 = vmatprep.subr.bf16.mxu0 %v387
    %555 = vmatpush1.bf16.xpose.msra.mxu0 %v386
    %556 = vmatprep.subr.bf16.mxu0 %v379
    %557 = vmatpush1.bf16.xpose.msra.mxu0 %v378
    %558 = vmatprep.subr.bf16.mxu0 %v371
    %559 = vmatpush1.bf16.xpose.msra.mxu0 %v370
    %560 = vmatprep.subr.bf16.mxu0 %v363
    %561 = vmatpush1.bf16.xpose.msra.mxu0 %v362
    %562 = vmatprep.subr.bf16.mxu0 %v355
    %563 = vmatpush1.bf16.xpose.msra.mxu0 %v354
    %564 = vmatprep.subr.bf16.mxu0 %v347
    %565 = vmatpush1.bf16.xpose.msra.mxu0 %v346
    %566 = vmatprep.subr.bf16.mxu0 0
    %567 = vmatpush2.bf16.xpose.msra.mxu0 0
    %568 = vmatprep.subr.bf16.mxu0 0
    %569 = vmatpush2.bf16.xpose.msra.mxu0 0
    %570 = vmatprep.subr.bf16.mxu0 0
    %571 = vmatpush2.bf16.xpose.msra.mxu0 0
    %572 = vmatprep.subr.bf16.mxu0 0
    %573 = vmatpush2.bf16.xpose.msra.mxu0 0
    %574 = vmatprep.subr.bf16.mxu0 0
    %575 = vmatpush2.bf16.xpose.msra.mxu0 0
    %576 = vmatprep.subr.bf16.mxu0 0
    %577 = vmatpush2.bf16.xpose.msra.mxu0 0
    %578 = vmatprep.subr.bf16.mxu0 0
    %579 = vmatpush2.bf16.xpose.msra.mxu0 0
    %580 = vmatprep.subr.bf16.mxu0 0
    %581 = vmatpush2.bf16.xpose.msra.mxu0 0
    %582 = vmatprep.mubr.bf16.mxu0 %v137
    %583 = vmatmul.mubr.bf16.gmra.mxu0 %v123
    %v584 = vpop.f32.mrf.mxu0
    %v585 = vadd.f32 %v545, %v584
    %v586 = vpop.f32.mrf.mxu0
    %v587 = vpop.f32.mrf.mxu0
    %v588 = vpop.f32.mrf.mxu0
    %589 = vdwg.mxu0
    %590 = vmatprep.subr.bf16.mxu0 %v405
    %591 = vmatpush1.bf16.xpose.msra.mxu0 %v404
    %592 = vmatprep.subr.bf16.mxu0 %v397
    %593 = vmatpush1.bf16.xpose.msra.mxu0 %v396
    %594 = vmatprep.subr.bf16.mxu0 %v389
    %595 = vmatpush1.bf16.xpose.msra.mxu0 %v388
    %596 = vmatprep.subr.bf16.mxu0 %v381
    %597 = vmatpush1.bf16.xpose.msra.mxu0 %v380
    %598 = vmatprep.subr.bf16.mxu0 %v373
    %599 = vmatpush1.bf16.xpose.msra.mxu0 %v372
    %600 = vmatprep.subr.bf16.mxu0 %v365
    %601 = vmatpush1.bf16.xpose.msra.mxu0 %v364
    %602 = vmatprep.subr.bf16.mxu0 %v357
    %603 = vmatpush1.bf16.xpose.msra.mxu0 %v356
    %604 = vmatprep.subr.bf16.mxu0 %v349
    %605 = vmatpush1.bf16.xpose.msra.mxu0 %v348
    %606 = vmatprep.subr.bf16.mxu0 0
    %607 = vmatpush2.bf16.xpose.msra.mxu0 0
    %608 = vmatprep.subr.bf16.mxu0 0
    %609 = vmatpush2.bf16.xpose.msra.mxu0 0
    %610 = vmatprep.subr.bf16.mxu0 0
    %611 = vmatpush2.bf16.xpose.msra.mxu0 0
    %612 = vmatprep.subr.bf16.mxu0 0
    %613 = vmatpush2.bf16.xpose.msra.mxu0 0
    %614 = vmatprep.subr.bf16.mxu0 0
    %615 = vmatpush2.bf16.xpose.msra.mxu0 0
    %616 = vmatprep.subr.bf16.mxu0 0
    %617 = vmatpush2.bf16.xpose.msra.mxu0 0
    %618 = vmatprep.subr.bf16.mxu0 0
    %619 = vmatpush2.bf16.xpose.msra.mxu0 0
    %620 = vmatprep.subr.bf16.mxu0 0
    %621 = vmatpush2.bf16.xpose.msra.mxu0 0
    %622 = vmatprep.mubr.bf16.mxu0 %v141
    %623 = vmatmul.mubr.bf16.gmra.mxu0 %v139
    %v624 = vpop.f32.mrf.mxu0
    %v625 = vadd.f32 %v585, %v624
    %v626 = vpop.f32.mrf.mxu0
    %v627 = vpop.f32.mrf.mxu0
    %v628 = vpop.f32.mrf.mxu0
    %629 = vdwg.mxu0
    %630 = vst [vmem:[#allocation5] sm:$0x3] %v625
    // Predicated region
    $region14: #{dense_classifier_forward.1} parent=1 // pred_check
      _
    $region15: #{dense_classifier_forward.1} parent=1 // pred_check_branch
      %632 = sbr.rel (0) target = $region17
    $region16: #{dense_classifier_forward.1} parent=1 // pred_region
      %s634 = ssub.s32 32, 32
      %635 = vsyncadd [#allocation4], %s634
      %s637 = sshll.u32 [#allocation5], 4
      %s638 = int_to_ptr.vmem [resolvable:$true] %s637
      %640 = dma.vmem_to_hbm [thread:$0]  %s638, 32, %s2, [#allocation4]
    $region17: #{dense_classifier_forward.1} parent=1 // pred_fallthru
      _
    // Predicated region
    $region18: #{dense_classifier_forward.1} parent=1 // pred_check
      _
    $region19: #{dense_classifier_forward.1} parent=1 // pred_check_branch
      %642 = sbr.rel (0) target = $region21
    $region20: #{dense_classifier_forward.1} parent=1 // pred_region
      %643 = dma.done [#allocation4], 32
    $region21: #{dense_classifier_forward.1} parent=1 // pred_fallthru
      _
    %644 = vsyncpa [#allocation3], 1
    %645 = vsyncpa [#allocation4], 1

</llo_original>
